<compile_context>
chip_gen: v7x
topology: tpu7x:2x2x1
jax: 0.10.0
libtpu: 0.0.40
codegen_flags: <defaults>
</compile_context>

<pallas_src>
import jax
import jax.numpy as jnp
from jax.experimental import pallas as pl
from jax.experimental.pallas import tpu as pltpu

# ----------------------- small synthetic config -----------------------------
BLOCK_DIMS = (4, 8, 16)        # block_dims [d0, d1, d2]  (real model: [64,128,256])
FINE_WINDOW = 8                # config['fine_window_size']
BN_EPS = 1e-5
LEAKY_SLOPE = 0.01             # nn.LeakyReLU() default
COMPUTE_DTYPE = jnp.bfloat16   # activations / weights (accumulation is f32)
VMEM_LIMIT = 64 * 1024 * 1024  # explicit scoped-VMEM cap (fits v7x 64 MiB physical)
PW_BLOCK_M = 256               # row tile of the pointwise (1x1) conv kernel
C3_ROW_TARGET = 1024           # flat-row tile target of the fused 3x3 kernel
GATHER_GROUP = 8               # windows gathered per grid step


def _round_up(x, m):
    return (x + m - 1) // m * m


def _pick_flat_tile(total, target):
    """Largest tile <= target that divides `total` and is a multiple of 8
    (falls back to the full extent, which is always a legal block)."""
    if total <= target:
        return total
    t = (target // 8) * 8
    while t >= 8:
        if total % t == 0:
            return t
        t -= 8
    return total


# --------------------- Pallas kernel: 1x1 conv (+skip) -----------------------
def _pointwise_kernel(has_res):
    def kernel(x_ref, w_ref, *rest):
        if has_res:
            res_ref, o_ref = rest
        else:
            (o_ref,) = rest
        acc = jnp.dot(x_ref[...], w_ref[...], preferred_element_type=jnp.float32)
        if has_res:
            acc = acc + res_ref[...].astype(jnp.float32)   # FPN skip connection
        o_ref[...] = acc.astype(o_ref.dtype)
    return kernel


def conv1x1(x, w, residual=None):
    """x: NHWC [N,H,W,Cin] (bf16); w: [Cin,Cout] (bf16); residual: NHWC [N,H,W,Cout]."""
    N, H, Wd, Cin = x.shape
    Cout = w.shape[1]
    rows = N * H * Wd
    bm = PW_BLOCK_M if rows >= PW_BLOCK_M else _round_up(rows, 8)
    rows_p = _round_up(rows, bm)

    x2 = x.reshape(rows, Cin)
    if rows_p != rows:
        x2 = jnp.pad(x2, ((0, rows_p - rows), (0, 0)))
    args = [x2, w]
    in_specs = [pl.BlockSpec((bm, Cin), lambda i: (i, 0)),
                pl.BlockSpec((Cin, Cout), lambda i: (0, 0))]
    if residual is not None:
        r2 = residual.reshape(rows, Cout)
        if rows_p != rows:
            r2 = jnp.pad(r2, ((0, rows_p - rows), (0, 0)))
        args.append(r2)
        in_specs.append(pl.BlockSpec((bm, Cout), lambda i: (i, 0)))

    out = pl.pallas_call(
        _pointwise_kernel(residual is not None),
        out_shape=jax.ShapeDtypeStruct((rows_p, Cout), COMPUTE_DTYPE),
        grid=(rows_p // bm,),
        in_specs=in_specs,
        out_specs=pl.BlockSpec((bm, Cout), lambda i: (i, 0)),
        compiler_params=pltpu.CompilerParams(
            dimension_semantics=("parallel",),
            vmem_limit_bytes=VMEM_LIMIT),
    )(*args)
    return out[:rows].reshape(N, H, Wd, Cout)


# ---- Pallas kernel: fused conv3x3 -> BN(eval) -> LeakyReLU -> conv3x3 -------
def _dual3x3_kernel(Wp, T, H1, CH, Cmid, Cout, leaky_slope):
    def kernel(x_hbm, w1_ref, w2_ref, scale_ref, shift_ref, o_ref,
               xbuf, ibuf, sem):
        n = pl.program_id(0)
        i = pl.program_id(1)
        # One contiguous DMA of the flat halo chunk needed by this output tile.
        cp = pltpu.make_async_copy(x_hbm.at[n, pl.ds(i * T, CH), :],
                                   xbuf, sem.at[0])
        cp.start()
        cp.wait()
        # conv3x3 #1: 9 contiguous row-shifted slices -> MXU, f32 accumulation.
        acc = jnp.zeros((H1, Cmid), jnp.float32)
        for dy in range(3):
            for dx in range(3):
                off = dy * Wp + dx
                acc = acc + jnp.dot(xbuf[pl.ds(off, H1), :],
                                    w1_ref[dy * 3 + dx],
                                    preferred_element_type=jnp.float32)
        # folded eval-mode BatchNorm affine + LeakyReLU on the f32 accumulator.
        y = acc * scale_ref[...] + shift_ref[...]
        y = jnp.where(y >= 0, y, leaky_slope * y)
        ibuf[...] = y.astype(ibuf.dtype)            # intermediate stays in VMEM
        # conv3x3 #2.
        acc2 = jnp.zeros((T, Cout), jnp.float32)
        for dy in range(3):
            for dx in range(3):
                off = dy * Wp + dx
                acc2 = acc2 + jnp.dot(ibuf[pl.ds(off, T), :],
                                      w2_ref[dy * 3 + dx],
                                      preferred_element_type=jnp.float32)
        o_ref[0] = acc2.astype(o_ref.dtype)
    return kernel


def conv3x3_block(x, w1, scale, shift, w2):
    """Fused conv3x3 -> BatchNorm(eval) -> LeakyReLU -> conv3x3 (NHWC in/out).

    The input is zero-padded by 2 and flattened to [H*Wp, C]; a 3x3 tap is then
    a contiguous row-shifted slice.  Garbage produced at horizontal wrap
    positions stays in the pad columns, which are sliced off afterwards.
    """
    N, H, Wd, Cin = x.shape
    Cmid = w1.shape[-1]
    Cout = w2.shape[-1]
    Wp = Wd + 4                           # width padded by 2 on each side
    Hp = H + 4
    Q2 = H * Wp                           # flat output rows per image (pad cols kept)
    T = _pick_flat_tile(Q2, C3_ROW_TARGET)
    H1 = T + 2 * Wp + 2                   # intermediate rows per tile (with halo)
    CH = T + 4 * Wp + 4                   # input rows DMA'd per tile (with halo)

    xp = jnp.pad(x, ((0, 0), (2, 2), (2, 2), (0, 0)))
    # tail pad keeps the halo DMA of the last tile inside the HBM array.
    xflat = jnp.pad(xp.reshape(N, Hp * Wp, Cin), ((0, 0), (0, 8), (0, 0)))

    out = pl.pallas_call(
        _dual3x3_kernel(Wp, T, H1, CH, Cmid, Cout, LEAKY_SLOPE),
        out_shape=jax.ShapeDtypeStruct((N, Q2, Cout), COMPUTE_DTYPE),
        grid=(N, Q2 // T),
        in_specs=[pl.BlockSpec(memory_space=pl.ANY),          # flat map stays in HBM
                  pl.BlockSpec((9, Cin, Cmid), lambda n, i: (0, 0, 0)),
                  pl.BlockSpec((9, Cmid, Cout), lambda n, i: (0, 0, 0)),
                  pl.BlockSpec((1, Cmid), lambda n, i: (0, 0)),
                  pl.BlockSpec((1, Cmid), lambda n, i: (0, 0))],
        out_specs=pl.BlockSpec((1, T, Cout), lambda n, i: (n, i, 0)),
        scratch_shapes=[pltpu.VMEM((CH, Cin), COMPUTE_DTYPE),
                        pltpu.VMEM((H1, Cmid), COMPUTE_DTYPE),
                        pltpu.SemaphoreType.DMA((1,))],
        compiler_params=pltpu.CompilerParams(
            dimension_semantics=("parallel", "arbitrary"),
            vmem_limit_bytes=VMEM_LIMIT),
    )(xflat, w1, w2, scale, shift)
    # drop the horizontal pad columns: [N, H*Wp, Cout] -> [N, H, W, Cout]
    return out.reshape(N, H, Wp, Cout)[:, :, :Wd, :]


# ---------- Pallas kernel: DMA gather of the M selected fine windows ---------
def _gather_kernel(nWx, stride, win, group):
    def kernel(b_ref, l_ref, src_hbm, o_ref, buf, sem):
        m = pl.program_id(0)
        copies = []
        for g in range(group):                  # static unroll; DMAs overlap
            idx = m * group + g
            b = b_ref[idx]
            l = l_ref[idx]
            r0 = (l // nWx) * stride
            c0 = (l % nWx) * stride
            cp = pltpu.make_async_copy(
                src_hbm.at[b, pl.ds(r0, win), pl.ds(c0, win), :],
                buf.at[g], sem.at[g])
            cp.start()
            copies.append(cp)
        for cp in copies:
            cp.wait()
        o_ref[...] = buf[...]
    return kernel


def gather_windows(feat, b_ids, l_ids, win, stride, pad):
    """DMA-gather only the M selected win x win windows from NHWC `feat`.
    Returns [M, win*win, C] (the reference `[b_ids, ids]` result layout)."""
    N, Hf, Wf, C = feat.shape
    if pad:
        feat = jnp.pad(feat, ((0, 0), (pad, pad), (pad, pad), (0, 0)))
        Hf, Wf = Hf + 2 * pad, Wf + 2 * pad
    nWx = (Wf - win) // stride + 1
    M = b_ids.shape[0]
    Mp = _round_up(max(M, 1), GATHER_GROUP)
    b_p = jnp.pad(b_ids.astype(jnp.int32), (0, Mp - M))
    l_p = jnp.pad(l_ids.astype(jnp.int32), (0, Mp - M))

    out = pl.pallas_call(
        _gather_kernel(nWx, stride, win, GATHER_GROUP),
        out_shape=jax.ShapeDtypeStruct((Mp, win, win, C), feat.dtype),
        grid_spec=pltpu.PrefetchScalarGridSpec(
            num_scalar_prefetch=2,
            grid=(Mp // GATHER_GROUP,),
            in_specs=[pl.BlockSpec(memory_space=pl.ANY)],
            out_specs=pl.BlockSpec((GATHER_GROUP, win, win, C),
                                   lambda m, b_ref, l_ref: (m, 0, 0, 0)),
            scratch_shapes=[pltpu.VMEM((GATHER_GROUP, win, win, C), feat.dtype),
                            pltpu.SemaphoreType.DMA((GATHER_GROUP,))]),
        compiler_params=pltpu.CompilerParams(
            dimension_semantics=("arbitrary",),
            vmem_limit_bytes=VMEM_LIMIT),
    )(b_p, l_p, feat)
    return out[:M].reshape(M, win * win, C)


# ------------------------------ JAX glue -------------------------------------
def upsample2x(x):
    """Bilinear 2x upsample (NHWC), matching F.interpolate(align_corners=False).
    TODO(synk): still plain XLA; fusing it into the consuming Pallas kernel
    requires an overlapping (halo) coarse-row DMA and is left as future work."""
    N, H, Wd, C = x.shape
    prev = jnp.concatenate([x[:, :1], x[:, :-1]], axis=1)
    nxt = jnp.concatenate([x[:, 1:], x[:, -1:]], axis=1)
    even = 0.25 * prev + 0.75 * x
    odd = 0.75 * x + 0.25 * nxt
    x = jnp.stack([even, odd], axis=2).reshape(N, 2 * H, Wd, C)
    prev = jnp.concatenate([x[:, :, :1], x[:, :, :-1]], axis=2)
    nxt = jnp.concatenate([x[:, :, 1:], x[:, :, -1:]], axis=2)
    even = 0.25 * prev + 0.75 * x
    odd = 0.75 * x + 0.25 * nxt
    return jnp.stack([even, odd], axis=3).reshape(N, 2 * H, 2 * Wd, C)


def _kaiming_taps(key, kh, kw, cin, cout):
    """kaiming_normal_(mode='fan_out', nonlinearity='relu'), tap layout [kh*kw, Cin, Cout].
    NOTE: a PyTorch conv weight [Cout, Cin, kh, kw] maps to taps[dy*3+dx] = w[:,:,dy,dx].T."""
    fan_out = cout * kh * kw
    std = (2.0 / fan_out) ** 0.5
    w = std * jax.random.normal(key, (kh * kw, cin, cout), jnp.float32)
    return w.astype(COMPUTE_DTYPE)


def init_params(key):
    d0, d1, d2 = BLOCK_DIMS
    ks = jax.random.split(key, 7)
    inv = jnp.float32(1.0 / (1.0 + BN_EPS) ** 0.5)
    # TODO(synk): BatchNorm2d is folded with inference (running) statistics
    # (mean=0, var=1, gamma=1, beta=0); real checkpoints must fold
    # gamma/beta/running_mean/running_var into scale/shift before the kernel.
    return dict(
        l3=_kaiming_taps(ks[0], 1, 1, d2, d2)[0],    # layer3_outconv   (1x1, d2->d2)
        l2a=_kaiming_taps(ks[1], 1, 1, d1, d2)[0],   # layer2_outconv   (1x1, d1->d2)
        l2b1=_kaiming_taps(ks[2], 3, 3, d2, d2),     # layer2_outconv2[0] (3x3, d2->d2)
        l2b2=_kaiming_taps(ks[3], 3, 3, d2, d1),     # layer2_outconv2[3] (3x3, d2->d1)
        l1a=_kaiming_taps(ks[4], 1, 1, d0, d1)[0],   # layer1_outconv   (1x1, d0->d1)
        l1b1=_kaiming_taps(ks[5], 3, 3, d1, d1),     # layer1_outconv2[0] (3x3, d1->d1)
        l1b2=_kaiming_taps(ks[6], 3, 3, d1, d0),     # layer1_outconv2[3] (3x3, d1->d0)
        bn2_scale=jnp.full((1, d2), inv, jnp.float32),
        bn2_shift=jnp.zeros((1, d2), jnp.float32),
        bn1_scale=jnp.full((1, d1), inv, jnp.float32),
        bn1_shift=jnp.zeros((1, d1), jnp.float32),
    )


def inter_fpn(p, feat_c, x2, x1):
    c = conv1x1(feat_c, p['l3'])                          # layer3_outconv
    c = upsample2x(c)
    y2 = conv1x1(x2, p['l2a'], residual=c)                # layer2_outconv + skip add
    y2 = conv3x3_block(y2, p['l2b1'], p['bn2_scale'], p['bn2_shift'], p['l2b2'])
    y2 = upsample2x(y2)
    y1 = conv1x1(x1, p['l1a'], residual=y2)               # layer1_outconv + skip add
    y1 = conv3x3_block(y1, p['l1b1'], p['bn1_scale'], p['bn1_shift'], p['l1b2'])
    return upsample2x(y1)


def fine_preprocess_forward(params, feat_c0, feat_c1, hw0_f, hw0_c, b_ids,
                            hw0_i, hw1_i, feats, i_ids, j_ids, hw1_c):
    W = FINE_WINDOW
    d0 = BLOCK_DIMS[0]
    stride = hw0_f[0] // hw0_c[0]
    if b_ids.shape[0] == 0:
        feat0 = jnp.zeros((0, W * W, d0), jnp.float32)
        feat1 = jnp.zeros((0, W * W, d0), jnp.float32)
        return feat0, feat1, W

    N = feat_c0.shape[0]
    # torch: permute+chunk+stack builds NCHW coarse maps; NHWC equivalent here.
    c0 = feat_c0.reshape(N, hw0_c[0], hw0_c[1], feat_c0.shape[-1]).astype(COMPUTE_DTYPE)
    c1 = feat_c1.reshape(N, hw1_c[0], hw1_c[1], feat_c1.shape[-1]).astype(COMPUTE_DTYPE)

    # feats = [x2_0, x1_0, x2_1, x1_1] in PyTorch NCHW -> NHWC bf16 for the kernels.
    x2_0, x1_0, x2_1, x1_1 = [
        jnp.transpose(f, (0, 2, 3, 1)).astype(COMPUTE_DTYPE) for f in feats]

    feat_f0 = inter_fpn(params, c0, x2_0, x1_0)     # [N, 8*Hc, 8*Wc, d0]
    feat_f1 = inter_fpn(params, c1, x2_1, x1_1)

    # Selected-window DMA gather (replaces unfold-all-windows + full gather).
    # Produces [M, ww, C] with b_ids indexing the batch axis (LoFTR semantics;
    # fixes the layout bug flagged in the perf review).
    feat0 = gather_windows(feat_f0, b_ids, i_ids, win=W, stride=stride, pad=0)
    feat1 = gather_windows(feat_f1, b_ids, j_ids, win=W + 2, stride=stride, pad=1)
    return feat0.astype(jnp.float32), feat1.astype(jnp.float32), W


# --------------------------------- demo ---------------------------------------
if __name__ == "__main__":
    key = jax.random.PRNGKey(0)
    kp, k0, k1, k2, k3, k4, k5 = jax.random.split(key, 7)
    d0, d1, d2 = BLOCK_DIMS
    N, Hc, Wc = 2, 4, 4
    hw0_c = (Hc, Wc)
    hw1_c = (Hc, Wc)
    hw0_f = (8 * Hc, 8 * Wc)       # stride = hw0_f / hw0_c = 8 (three bilinear x2 stages)
    hw0_i = (8 * Hc, 8 * Wc)
    hw1_i = (8 * Hc, 8 * Wc)

    params = init_params(kp)

    feat_c0 = jax.random.normal(k0, (N, Hc * Wc, d2), jnp.float32)
    feat_c1 = jax.random.normal(k1, (N, Hc * Wc, d2), jnp.float32)
    # feats = [x2_0, x1_0, x2_1, x1_1]  (NCHW, as a torch backbone would give)
    x2_0 = jax.random.normal(k2, (N, d1, 2 * Hc, 2 * Wc), jnp.float32)
    x1_0 = jax.random.normal(k3, (N, d0, 4 * Hc, 4 * Wc), jnp.float32)
    x2_1 = jax.random.normal(k4, (N, d1, 2 * Hc, 2 * Wc), jnp.float32)
    x1_1 = jax.random.normal(k5, (N, d0, 4 * Hc, 4 * Wc), jnp.float32)
    feats = [x2_0, x1_0, x2_1, x1_1]

    b_ids = jnp.array([0, 1, 0, 1, 1], jnp.int32)
    i_ids = jnp.array([0, 3, 7, 10, 15], jnp.int32)
    j_ids = jnp.array([1, 2, 5, 9, 14], jnp.int32)

    feat0, feat1, W = fine_preprocess_forward(
        params, feat_c0, feat_c1, hw0_f, hw0_c, b_ids, hw0_i, hw1_i,
        feats, i_ids, j_ids, hw1_c)
    jax.block_until_ready((feat0, feat1))
    assert feat0.shape == (b_ids.shape[0], W * W, d0), feat0.shape
    assert feat1.shape == (b_ids.shape[0], (W + 2) * (W + 2), d0), feat1.shape
    assert bool(jnp.isfinite(feat0).all()) and bool(jnp.isfinite(feat1).all())
    print("KERNEL_OK")
</pallas_src>

<mosaic_0001>
module attributes {stable_mosaic.version = 11 : i64} {
  func.func @kernel(%arg0: i32, %arg1: memref<32x16xbf16, #tpu.memory_space<vmem>>, %arg2: memref<16x16xbf16, #tpu.memory_space<vmem>>, %arg3: memref<32x16xbf16, #tpu.memory_space<vmem>>) attributes {dimension_semantics = [#tpu.dimension_semantics<parallel>], iteration_bounds = array<i64: 1>, scalar_prefetch = 0 : i64, scratch_operands = 0 : i64, tpu.core_type = #tpu.core_type<tc>, window_params = [{transform_indices = @transform_0, window_bounds = array<i64: 32, 16>}, {pipeline_mode = #tpu.pipeline_mode<synchronous>, transform_indices = @transform_1, window_bounds = array<i64: 16, 16>}, {transform_indices = @transform_2, window_bounds = array<i64: 32, 16>}]} {
    %c0 = arith.constant 0 : index
    %c0_0 = arith.constant 0 : index
    %0 = vector.load %arg1[%c0, %c0_0] : memref<32x16xbf16, #tpu.memory_space<vmem>>, vector<32x16xbf16>
    %c0_1 = arith.constant 0 : index
    %c0_2 = arith.constant 0 : index
    %1 = vector.load %arg2[%c0_1, %c0_2] : memref<16x16xbf16, #tpu.memory_space<vmem>>, vector<16x16xbf16>
    %cst = arith.constant dense<0.000000e+00> : vector<32x16xf32>
    %2 = tpu.matmul %0, %1, %cst {dimension_numbers = #tpu.dot_dimension_numbers<[1], [0], [0], [1], [0, 0, 1, 1], [], []>} : vector<32x16xbf16>, vector<16x16xbf16>, vector<32x16xf32> -> vector<32x16xf32>
    %3 = arith.truncf %2 : vector<32x16xf32> to vector<32x16xbf16>
    %c0_3 = arith.constant 0 : index
    %c0_4 = arith.constant 0 : index
    %4 = vector.load %arg3[%c0_3, %c0_4] : memref<32x16xbf16, #tpu.memory_space<vmem>>, vector<32x16xbf16>
    tpu.vector_store %arg3[%c0_3, %c0_4], %3 {strides = array<i32>} : memref<32x16xbf16, #tpu.memory_space<vmem>>, vector<32x16xbf16>,
    return
  }
  func.func @transform_0(%arg0: i32) -> (i32, i32) {
    %c0_i32 = arith.constant 0 : i32
    %c0_i32_0 = arith.constant 0 : i32
    return %arg0, %c0_i32 : i32, i32
  }
  func.func @transform_1(%arg0: i32) -> (i32, i32) {
    %c0_i32 = arith.constant 0 : i32
    %c0_i32_0 = arith.constant 0 : i32
    %c0_i32_1 = arith.constant 0 : i32
    return %c0_i32, %c0_i32_0 : i32, i32
  }
  func.func @transform_2(%arg0: i32) -> (i32, i32) {
    %c0_i32 = arith.constant 0 : i32
    %c0_i32_0 = arith.constant 0 : i32
    return %arg0, %c0_i32 : i32, i32
  }
}

</mosaic_0001>

<llo_original>
// kernel: tpu_custom_call.1
$region0: #{tpu_custom_call.1}
  #allocation0 [shape = 'u32[]', space=smem, size = 0x4, offset = 0x4, fixed_abs, tag = 'smem constant byte address 0x4 - core index']
  #allocation1 [shape = 'u32[144,128]{1,0:T(1,128)}', space=vmem, size = 0x12000, scoped, tag = 'internal scratch']
  %s0 = inlined_call_operand.hbm [shape: bf16[32,16], index: 0, kind: input, shape index: {}]
  %s1 = inlined_call_operand.hbm [shape: bf16[16,16], index: 1, kind: input, shape index: {}]
  %s2 = inlined_call_operand.hbm [shape: bf16[32,16], index: 2, kind: output, shape index: {}]
  %s3 = sld [smem:[#allocation0]]
  $region26: #{tpu_custom_call.1} parent=0
    _
  %s5 = ssub.s32 1, %s3
  %s6 = scalar_select 0, %s5, %s3
  $region1: #{tpu_custom_call.1} parent=0
    #allocation2 [shape = 'u8[8192]{0}', space=vmem, size = 0x2000, scoped, tag = 'input window, operand 0, single buffered']
    #allocation3 [shape = 's32[1]{0}', space=sflag, size = 0x4, scoped, tag = 'scoped memory for tpu_custom_call.1']
    #allocation4 [shape = 's32[1]{0}', space=sflag, size = 0x4, scoped, tag = 'scoped memory for tpu_custom_call.1']
    #allocation5 [shape = 'u8[4096]{0}', space=vmem, size = 0x1000, scoped, tag = 'input window, operand 1, single buffered']
    #allocation6 [shape = 's32[1]{0}', space=sflag, size = 0x4, scoped, tag = 'scoped memory for tpu_custom_call.1']
    #allocation7 [shape = 'u8[8192]{0}', space=vmem, size = 0x2000, scoped, tag = 'output window, operand 0, single buffered']
    %7 = vsyncpa [#allocation3], 0
    %8 = vsyncpa [#allocation6], 0
    %9 = vsyncpa [#allocation4], 0
    // Predicated region
    $region2: #{tpu_custom_call.1} parent=1 // pred_check
      _
    $region3: #{tpu_custom_call.1} parent=1 // pred_check_branch
      %11 = sbr.rel (0) target = $region5
    $region4: #{tpu_custom_call.1} parent=1 // pred_region
      %s13 = ssub.s32 256, 256
      %14 = vsyncadd [#allocation3], %s13
      %s15 = sshll.u32 [#allocation2], 4
      %s16 = int_to_ptr.vmem [resolvable:$true] %s15
      %21 = dma.hbm_to_vmem [thread:$0]  %s0, 256, %s16, [#allocation3], 64, 64, 4
    $region5: #{tpu_custom_call.1} parent=1 // pred_fallthru
      _
    // Predicated region
    $region6: #{tpu_custom_call.1} parent=1 // pred_check
      _
    $region7: #{tpu_custom_call.1} parent=1 // pred_check_branch
      %23 = sbr.rel (0) target = $region9
    $region8: #{tpu_custom_call.1} parent=1 // pred_region
      %s25 = ssub.s32 128, 128
      %26 = vsyncadd [#allocation6], %s25
      %s27 = sshll.u32 [#allocation5], 4
      %s28 = int_to_ptr.vmem [resolvable:$true] %s27
      %33 = dma.hbm_to_vmem [thread:$0]  %s1, 128, %s28, [#allocation6], 64, 64, 4
    $region9: #{tpu_custom_call.1} parent=1 // pred_fallthru
      _
    // Predicated region
    $region10: #{tpu_custom_call.1} parent=1 // pred_check
      _
    $region11: #{tpu_custom_call.1} parent=1 // pred_check_branch
      %35 = sbr.rel (0) target = $region13
    $region12: #{tpu_custom_call.1} parent=1 // pred_region
      %36 = dma.done [#allocation3], 256
    $region13: #{tpu_custom_call.1} parent=1 // pred_fallthru
      _
    // Predicated region
    $region14: #{tpu_custom_call.1} parent=1 // pred_check
      _
    $region15: #{tpu_custom_call.1} parent=1 // pred_check_branch
      %38 = sbr.rel (0) target = $region17
    $region16: #{tpu_custom_call.1} parent=1 // pred_region
      %39 = dma.done [#allocation6], 128
    $region17: #{tpu_custom_call.1} parent=1 // pred_fallthru
      _
    %v41 = vld [vmem:[#allocation2] sm:$0xf]
    %v42 = vld [vmem:[#allocation2 + $0x4] sm:$0xf]
    %v43 = vld [vmem:[#allocation2 + $0x8] sm:$0xf]
    %v44 = vld [vmem:[#allocation2 + $0xc] sm:$0xf]
    %v45 = vld [vmem:[#allocation5] sm:$0xf]
    %v46 = vld [vmem:[#allocation5 + $0x4] sm:$0xf]
    %v51 = vunpack.c.l.b16 %v41
    %v52 = vunpack.c.l.b16 %v42
    %v53 = vunpack.c.l.b16 %v43
    %v54 = vunpack.c.l.b16 %v44
    %v55 = vpack.c.b16 %v52, %v51
    %v56 = vpack.c.b16 %v54, %v53
    %v59 = vunpack.c.l.b16 %v45
    %v60 = vunpack.c.l.b16 %v46
    %v61 = vpack.c.b16 %v60, %v59
    %vm63 = vcmask 130048
    %v65 = vsel %vm63, %v55, 0
    %v68 = vsel %vm63, %v56, 0
    %70 = vmatprep.subr.bf16.mxu0 0
    %71 = vmatpush1.bf16.msra.mxu0 %v61
    %72 = vmatprep.subr.bf16.mxu0 0
    %73 = vmatpush1.bf16.msra.mxu0 0
    %74 = vmatprep.subr.bf16.mxu0 0
    %75 = vmatpush1.bf16.msra.mxu0 0
    %76 = vmatprep.subr.bf16.mxu0 0
    %77 = vmatpush1.bf16.msra.mxu0 0
    %78 = vmatprep.subr.bf16.mxu0 0
    %79 = vmatpush1.bf16.msra.mxu0 0
    %80 = vmatprep.subr.bf16.mxu0 0
    %81 = vmatpush1.bf16.msra.mxu0 0
    %82 = vmatprep.subr.bf16.mxu0 0
    %83 = vmatpush1.bf16.msra.mxu0 0
    %84 = vmatprep.subr.bf16.mxu0 0
    %85 = vmatpush1.bf16.msra.mxu0 0
    %86 = vmatprep.subr.bf16.mxu0 0
    %87 = vmatpush1.bf16.msra.mxu0 0
    %88 = vmatprep.subr.bf16.mxu0 0
    %89 = vmatpush1.bf16.msra.mxu0 0
    %90 = vmatprep.subr.bf16.mxu0 0
    %91 = vmatpush1.bf16.msra.mxu0 0
    %92 = vmatprep.subr.bf16.mxu0 0
    %93 = vmatpush1.bf16.msra.mxu0 0
    %94 = vmatprep.subr.bf16.mxu0 0
    %95 = vmatpush1.bf16.msra.mxu0 0
    %96 = vmatprep.subr.bf16.mxu0 0
    %97 = vmatpush1.bf16.msra.mxu0 0
    %98 = vmatprep.subr.bf16.mxu0 0
    %99 = vmatpush1.bf16.msra.mxu0 0
    %100 = vmatprep.subr.bf16.mxu0 0
    %101 = vmatpush1.bf16.msra.mxu0 0
    %102 = vmatprep.mubr.bf16.mxu0 0
    %103 = vmatmul.mubr.bf16.gmra.mrb[0].mxu0 %v65
    %v104 = vpop.f32.mrb[0].mxu0
    %v105 = vadd.f32 0.0, %v104
    %v106 = vpop.f32.mrb[0].mxu0
    %v107 = vpop.f32.mrb[0].mxu0
    %v108 = vadd.f32 0.0, %v107
    %v109 = vpop.f32.mrb[0].mxu0
    %110 = vmatprep.mubr.bf16.mxu0 0
    %111 = vmatmul.mubr.bf16.gmra.mrb[0].mxu0 %v68
    %v112 = vpop.f32.mrb[0].mxu0
    %v113 = vadd.f32 0.0, %v112
    %v114 = vpop.f32.mrb[0].mxu0
    %v115 = vpop.f32.mrb[0].mxu0
    %v116 = vadd.f32 0.0, %v115
    %v117 = vpop.f32.mrb[0].mxu0
    %118 = vdwg.mxu0
    %v119 = vpack.c.bf16 %v108, %v105
    %v120 = vpack.c.bf16 %v116, %v113
    %v123 = vunpack.c.l.b16 %v119
    %v124 = vunpack.c.h.b16 %v119
    %v125 = vunpack.c.l.b16 %v120
    %v126 = vunpack.c.h.b16 %v120
    %v127 = vpack.c.b16 %v123, %v123
    %v128 = vpack.c.b16 %v124, %v124
    %v129 = vpack.c.b16 %v125, %v125
    %v130 = vpack.c.b16 %v126, %v126
    %vm135 = vcmask 125952
    %136 = vst.msk [vmem:[#allocation7] sm:$0xf] %vm135, %v127
    %137 = vst.msk [vmem:[#allocation7 + $0x4] sm:$0xf] %vm135, %v128
    %138 = vst.msk [vmem:[#allocation7 + $0x8] sm:$0xf] %vm135, %v129
    %139 = vst.msk [vmem:[#allocation7 + $0xc] sm:$0xf] %vm135, %v130
    // Predicated region
    $region18: #{tpu_custom_call.1} parent=1 // pred_check
      _
    $region19: #{tpu_custom_call.1} parent=1 // pred_check_branch
      %141 = sbr.rel (0) target = $region21
    $region20: #{tpu_custom_call.1} parent=1 // pred_region
      %s143 = ssub.s32 256, 256
      %144 = vsyncadd [#allocation4], %s143
      %s145 = sshll.u32 [#allocation7], 4
      %s146 = int_to_ptr.vmem [resolvable:$true] %s145
      %151 = dma.vmem_to_hbm [thread:$0]  %s146, 256, %s2, [#allocation4], 64, 64, 4
    $region21: #{tpu_custom_call.1} parent=1 // pred_fallthru
      _
    // Predicated region
    $region22: #{tpu_custom_call.1} parent=1 // pred_check
      _
    $region23: #{tpu_custom_call.1} parent=1 // pred_check_branch
      %153 = sbr.rel (0) target = $region25
    $region24: #{tpu_custom_call.1} parent=1 // pred_region
      %154 = dma.done [#allocation4], 256
    $region25: #{tpu_custom_call.1} parent=1 // pred_fallthru
      _
    %155 = vsyncpa [#allocation3], 1
    %156 = vsyncpa [#allocation6], 1
    %157 = vsyncpa [#allocation4], 1

</llo_original>
